<compile_context>
chip_gen: v6e
topology: v6e:2x2x1
jax: 0.10.0
libtpu: 0.0.40
codegen_flags: <defaults>
</compile_context>

<pallas_src>
import jax
import jax.numpy as jnp
from jax import lax
from jax.experimental import pallas as pl
from jax.experimental.pallas import tpu as pltpu


# Default LIParameters from norse:
TAU_SYN_INV = 1.0 / 5e-3   # 200.0
TAU_MEM_INV = 1.0 / 1e-2   # 100.0
V_LEAK = 0.0
DT = 1e-3

# Folded scalar constants (trace-time Python floats -> immediates in the kernel).
_A = DT * TAU_MEM_INV            # 0.1
_Bc = DT * TAU_SYN_INV           # 0.2
_V_COEF = 1.0 - _A               # v_new = v*_V_COEF + _A*i_jump + _LEAK_TERM
_I_COEF = 1.0 - _Bc              # i_new = i_jump*_I_COEF
_LEAK_TERM = _A * V_LEAK         # 0.0 for default params


def _li_epilogue(i_jump_f32, v_ref, v_out_ref, i_out_ref):
    """Folded leaky-integrator update from the f32 i_jump tile."""
    v_out_ref[...] = (v_ref[...] * _V_COEF + (_A * i_jump_f32 + _LEAK_TERM)
                      ).astype(v_out_ref.dtype)
    i_out_ref[...] = (i_jump_f32 * _I_COEF).astype(i_out_ref.dtype)


def _li_kernel_single_k(x_ref, w_ref, v_ref, i_ref, v_out_ref, i_out_ref):
    """2-D grid (batch tiles, hidden tiles): whole K reduction fits one tile.

    No accumulator scratch, no pl.when phases — outputs written directly.
    W is in native (H, K) layout; contract last dim of both operands on the MXU.
    """
    acc = lax.dot_general(
        x_ref[...], w_ref[...],
        dimension_numbers=(((1,), (1,)), ((), ())),
        preferred_element_type=jnp.float32,
    )
    i_jump = i_ref[...].astype(jnp.float32) + acc
    _li_epilogue(i_jump, v_ref, v_out_ref, i_out_ref)


def _li_kernel_multi_k(x_ref, w_ref, v_ref, i_ref, v_out_ref, i_out_ref, acc_ref):
    """3-D grid (batch tiles, hidden tiles, K tiles); K is the reduction axis (last)."""
    k = pl.program_id(2)

    @pl.when(k == 0)
    def _():
        # Seed the accumulator with the synaptic current -> no extra add in epilogue.
        acc_ref[...] = i_ref[...].astype(jnp.float32)

    acc_ref[...] += lax.dot_general(
        x_ref[...], w_ref[...],
        dimension_numbers=(((1,), (1,)), ((), ())),
        preferred_element_type=jnp.float32,
    )

    @pl.when(k == pl.num_programs(2) - 1)
    def _():
        _li_epilogue(acc_ref[...], v_ref, v_out_ref, i_out_ref)


def _round_up(n, m):
    return ((n + m - 1) // m) * m


def li_linear_cell(x, w, v, i, *, tb_max=1024, th_max=512, tk_max=2048,
                   mm_dtype=None):
    """One step of LILinearCell.

    x: (B, input_size); w: (hidden_size, input_size) (PyTorch nn.Linear layout,
    NOT transposed — kernel contracts against it natively); v, i: (B, hidden_size).
    mm_dtype: optional matmul dtype (e.g. jnp.bfloat16 on v5e/v6e); accumulation
    stays float32.  Returns (v_new, (v_new, i_new)).
    """
    B, K = x.shape
    H, Kw = w.shape
    assert K == Kw, "weight / input feature mismatch"
    dtype = x.dtype
    mm_dt = jnp.dtype(mm_dtype) if mm_dtype is not None else jnp.dtype(dtype)

    # Lane-dense padding: batch -> multiple of 8 (sublanes), K / H -> multiple of 128 (lanes).
    B_pad = _round_up(B, 8)
    K_pad = _round_up(K, 128)
    H_pad = _round_up(H, 128)

    # Tile selection: cover the full batch in one tile whenever it fits (W is then
    # read from HBM exactly once), large K/H tiles for fewer grid steps.
    TB = B_pad if B_pad <= tb_max else tb_max
    TH = H_pad if H_pad <= th_max else th_max
    TK = K_pad if K_pad <= tk_max else tk_max

    # v7x (2 TCs/chip): if the batch grid collapses to a single tile, split the
    # hidden axis into >= 2 parallel tiles so both TensorCores get work.
    if B_pad <= tb_max and H_pad <= th_max and H_pad >= 256:
        TH = _round_up((H_pad + 1) // 2, 128)

    B_pad = _round_up(B_pad, TB)
    H_pad = _round_up(H_pad, TH)
    K_pad = _round_up(K_pad, TK)

    # One-time layout plumbing: zero-pad only (no transpose — W stays (H, K)).
    # Callers looping over timesteps can hoist these pads; they are no-ops when
    # the dims are already lane-aligned.
    w_p = jnp.pad(w, ((0, H_pad - H), (0, K_pad - K))).astype(mm_dt)
    x_p = jnp.pad(x, ((0, B_pad - B), (0, K_pad - K))).astype(mm_dt)
    v_p = jnp.pad(v, ((0, B_pad - B), (0, H_pad - H)))
    i_p = jnp.pad(i, ((0, B_pad - B), (0, H_pad - H)))

    multi_k = K_pad > TK
    io_itemsize = jnp.dtype(dtype).itemsize
    mm_itemsize = mm_dt.itemsize

    # VMEM budget for the chosen tiles (double-buffered inputs/outputs + f32 acc),
    # capped at 48 MiB to respect v7x's 64 MiB/TC.
    vmem_need = (2 * (TB * TK + TH * TK) * mm_itemsize
                 + 2 * 4 * TB * TH * io_itemsize
                 + (TB * TH * 4 if multi_k else 0))
    vmem_limit = int(min(max(int(vmem_need * 1.25), 32 << 20), 48 << 20))

    cost = pl.CostEstimate(
        flops=2 * B_pad * H_pad * K_pad,
        transcendentals=0,
        bytes_accessed=(B_pad * K_pad + H_pad * K_pad) * mm_itemsize
                       + 4 * B_pad * H_pad * io_itemsize,
    )

    out_shape = (
        jax.ShapeDtypeStruct((B_pad, H_pad), dtype),
        jax.ShapeDtypeStruct((B_pad, H_pad), dtype),
    )

    if not multi_k:
        # Fast path: single K tile -> 2-D grid, no scratch, no phases.
        grid = (B_pad // TB, H_pad // TH)
        grid_spec = pltpu.PrefetchScalarGridSpec(
            num_scalar_prefetch=0,
            grid=grid,
            in_specs=[
                pl.BlockSpec((TB, TK), lambda bi, hi: (bi, 0)),    # x
                pl.BlockSpec((TH, TK), lambda bi, hi: (hi, 0)),    # W (native layout)
                pl.BlockSpec((TB, TH), lambda bi, hi: (bi, hi)),   # v
                pl.BlockSpec((TB, TH), lambda bi, hi: (bi, hi)),   # i
            ],
            out_specs=(
                pl.BlockSpec((TB, TH), lambda bi, hi: (bi, hi)),   # v_new
                pl.BlockSpec((TB, TH), lambda bi, hi: (bi, hi)),   # i_new
            ),
        )
        kernel = _li_kernel_single_k
        dim_sem = ("parallel", "parallel")
    else:
        grid = (B_pad // TB, H_pad // TH, K_pad // TK)
        grid_spec = pltpu.PrefetchScalarGridSpec(
            num_scalar_prefetch=0,
            grid=grid,
            in_specs=[
                pl.BlockSpec((TB, TK), lambda bi, hi, ki: (bi, ki)),   # x
                pl.BlockSpec((TH, TK), lambda bi, hi, ki: (hi, ki)),   # W (native layout)
                pl.BlockSpec((TB, TH), lambda bi, hi, ki: (bi, hi)),   # v
                pl.BlockSpec((TB, TH), lambda bi, hi, ki: (bi, hi)),   # i
            ],
            out_specs=(
                pl.BlockSpec((TB, TH), lambda bi, hi, ki: (bi, hi)),   # v_new
                pl.BlockSpec((TB, TH), lambda bi, hi, ki: (bi, hi)),   # i_new
            ),
            scratch_shapes=[pltpu.VMEM((TB, TH), jnp.float32)],
        )
        kernel = _li_kernel_multi_k
        dim_sem = ("parallel", "parallel", "arbitrary")

    v_new, i_new = pl.pallas_call(
        kernel,
        out_shape=out_shape,
        grid_spec=grid_spec,
        compiler_params=pltpu.CompilerParams(
            dimension_semantics=dim_sem,
            vmem_limit_bytes=vmem_limit,
        ),
        cost_estimate=cost,
    )(x_p, w_p, v_p, i_p)

    v_new = v_new[:B, :H]
    i_new = i_new[:B, :H]
    return v_new, (v_new, i_new)


if __name__ == "__main__":
    batch = 2
    input_size = 16
    hidden_size = 32

    key = jax.random.PRNGKey(0)
    kx, kw = jax.random.split(key)

    # Deterministic "module" parameter init: randn(hidden, input) / sqrt(input)
    w = (
        jax.random.normal(kw, (hidden_size, input_size), dtype=jnp.float32)
        / jnp.sqrt(jnp.float32(input_size))
    )
    x = jax.random.normal(kx, (batch, input_size), dtype=jnp.float32)

    # Fresh state, as in forward(state=None): v = v_leak (broadcast), i = zeros
    v0 = jnp.full((batch, hidden_size), V_LEAK, dtype=jnp.float32)
    i0 = jnp.zeros((batch, hidden_size), dtype=jnp.float32)

    v_new, (v_state, i_state) = jax.jit(li_linear_cell)(x, w, v0, i0)
    jax.block_until_ready((v_new, v_state, i_state))

    # Reference check in plain JAX (original, unfolded formulation).
    i_jump_ref = i0 + x @ w.T
    v_ref = v0 + DT * TAU_MEM_INV * ((V_LEAK - v0) + i_jump_ref)
    i_ref = i_jump_ref - DT * TAU_SYN_INV * i_jump_ref
    assert jnp.allclose(v_new, v_ref, atol=1e-5, rtol=1e-5)
    assert jnp.allclose(v_state, v_ref, atol=1e-5, rtol=1e-5)
    assert jnp.allclose(i_state, i_ref, atol=1e-5, rtol=1e-5)

    print("KERNEL_OK")
</pallas_src>

<mosaic_0001>
module attributes {stable_mosaic.version = 11 : i64} {
  func.func @_li_kernel_single_k(%arg0: i32, %arg1: i32, %arg2: memref<8x128xf32, #tpu.memory_space<vmem>>, %arg3: memref<128x128xf32, #tpu.memory_space<vmem>>, %arg4: memref<8x128xf32, #tpu.memory_space<vmem>>, %arg5: memref<8x128xf32, #tpu.memory_space<vmem>>, %arg6: memref<8x128xf32, #tpu.memory_space<vmem>>, %arg7: memref<8x128xf32, #tpu.memory_space<vmem>>) attributes {dimension_semantics = [#tpu.dimension_semantics<parallel>, #tpu.dimension_semantics<parallel>], iteration_bounds = array<i64: 1, 1>, scalar_prefetch = 0 : i64, scratch_operands = 0 : i64, tpu.core_type = #tpu.core_type<tc>, window_params = [{transform_indices = @transform_0, window_bounds = array<i64: 8, 128>}, {transform_indices = @transform_1, window_bounds = array<i64: 128, 128>}, {transform_indices = @transform_2, window_bounds = array<i64: 8, 128>}, {transform_indices = @transform_3, window_bounds = array<i64: 8, 128>}, {transform_indices = @transform_4, window_bounds = array<i64: 8, 128>}, {transform_indices = @transform_5, window_bounds = array<i64: 8, 128>}]} {
    %c0 = arith.constant 0 : index
    %c0_0 = arith.constant 0 : index
    %0 = vector.load %arg2[%c0, %c0_0] : memref<8x128xf32, #tpu.memory_space<vmem>>, vector<8x128xf32>
    %c0_1 = arith.constant 0 : index
    %c0_2 = arith.constant 0 : index
    %1 = vector.load %arg3[%c0_1, %c0_2] : memref<128x128xf32, #tpu.memory_space<vmem>>, vector<128x128xf32>
    %cst = arith.constant dense<0.000000e+00> : vector<8x128xf32>
    %2 = tpu.matmul %0, %1, %cst {dimension_numbers = #tpu.dot_dimension_numbers<[1], [1], [0], [0], [0, 0, 1, 0], [], []>} : vector<8x128xf32>, vector<128x128xf32>, vector<8x128xf32> -> vector<8x128xf32>
    %c0_3 = arith.constant 0 : index
    %c0_4 = arith.constant 0 : index
    %3 = vector.load %arg5[%c0_3, %c0_4] : memref<8x128xf32, #tpu.memory_space<vmem>>, vector<8x128xf32>
    %4 = arith.addf %3, %2 : vector<8x128xf32>
    %c0_5 = arith.constant 0 : index
    %c0_6 = arith.constant 0 : index
    %5 = vector.load %arg4[%c0_5, %c0_6] : memref<8x128xf32, #tpu.memory_space<vmem>>, vector<8x128xf32>
    %cst_7 = arith.constant 0.899999976 : f32
    %6 = vector.broadcast %cst_7 : f32 to vector<8x128xf32>
    %7 = arith.mulf %5, %6 : vector<8x128xf32>
    %cst_8 = arith.constant 1.000000e-01 : f32
    %8 = vector.broadcast %cst_8 : f32 to vector<8x128xf32>
    %9 = arith.mulf %8, %4 : vector<8x128xf32>
    %cst_9 = arith.constant 0.000000e+00 : f32
    %10 = vector.broadcast %cst_9 : f32 to vector<8x128xf32>
    %11 = arith.addf %9, %10 : vector<8x128xf32>
    %12 = arith.addf %7, %11 : vector<8x128xf32>
    %c0_10 = arith.constant 0 : index
    %c0_11 = arith.constant 0 : index
    %13 = vector.load %arg6[%c0_10, %c0_11] : memref<8x128xf32, #tpu.memory_space<vmem>>, vector<8x128xf32>
    tpu.vector_store %arg6[%c0_10, %c0_11], %12 {strides = array<i32>} : memref<8x128xf32, #tpu.memory_space<vmem>>, vector<8x128xf32>,
    %cst_12 = arith.constant 8.000000e-01 : f32
    %14 = vector.broadcast %cst_12 : f32 to vector<8x128xf32>
    %15 = arith.mulf %4, %14 : vector<8x128xf32>
    %c0_13 = arith.constant 0 : index
    %c0_14 = arith.constant 0 : index
    %16 = vector.load %arg7[%c0_13, %c0_14] : memref<8x128xf32, #tpu.memory_space<vmem>>, vector<8x128xf32>
    tpu.vector_store %arg7[%c0_13, %c0_14], %15 {strides = array<i32>} : memref<8x128xf32, #tpu.memory_space<vmem>>, vector<8x128xf32>,
    return
  }
  func.func @transform_0(%arg0: i32, %arg1: i32) -> (i32, i32) {
    %c0_i32 = arith.constant 0 : i32
    %c0_i32_0 = arith.constant 0 : i32
    return %arg0, %c0_i32 : i32, i32
  }
  func.func @transform_1(%arg0: i32, %arg1: i32) -> (i32, i32) {
    %c0_i32 = arith.constant 0 : i32
    %c0_i32_0 = arith.constant 0 : i32
    return %arg1, %c0_i32 : i32, i32
  }
  func.func @transform_2(%arg0: i32, %arg1: i32) -> (i32, i32) {
    %c0_i32 = arith.constant 0 : i32
    return %arg0, %arg1 : i32, i32
  }
  func.func @transform_3(%arg0: i32, %arg1: i32) -> (i32, i32) {
    %c0_i32 = arith.constant 0 : i32
    return %arg0, %arg1 : i32, i32
  }
  func.func @transform_4(%arg0: i32, %arg1: i32) -> (i32, i32) {
    %c0_i32 = arith.constant 0 : i32
    return %arg0, %arg1 : i32, i32
  }
  func.func @transform_5(%arg0: i32, %arg1: i32) -> (i32, i32) {
    %c0_i32 = arith.constant 0 : i32
    return %arg0, %arg1 : i32, i32
  }
}

</mosaic_0001>

<llo_original>
// kernel: li_linear_cell.1
$region0: #{li_linear_cell.1}
  #allocation0 [shape = 'u32[]', space=smem, size = 0x4, offset = 0x4, fixed_abs, tag = 'smem constant byte address 0x4 - core index']
  #allocation1 [shape = 'u32[144,128]{1,0:T(1,128)}', space=vmem, size = 0x12000, scoped, tag = 'internal scratch']
  %s0 = inlined_call_operand.vmem [shape: f32[8,128], index: 0, kind: input, shape index: {}]
  %s1 = inlined_call_operand.vmem [shape: f32[128,128], index: 1, kind: input, shape index: {}]
  %s2 = inlined_call_operand.vmem [shape: f32[8,128], index: 2, kind: input, shape index: {}]
  %s3 = inlined_call_operand.vmem [shape: f32[8,128], index: 3, kind: input, shape index: {}]
  %s4 = inlined_call_operand.vmem [shape: f32[8,128], index: 4, kind: output, shape index: {0}]
  %s5 = inlined_call_operand.vmem [shape: f32[8,128], index: 5, kind: output, shape index: {1}]
  %6 = xla_tuple %s4, %s5
  %s7 = sld [smem:[#allocation0]]
  $region34: #{li_linear_cell.1} parent=0
    _
  %s9 = ssub.s32 1, %s7
  %s10 = scalar_select 0, %s9, %s7
  // Predicated region
  $region2: #{li_linear_cell.1} parent=0 // pred_check
    _
  $region3: #{li_linear_cell.1} parent=0 // pred_check_branch
    %12 = sbr.rel (0) target = $region5
  $region4: #{li_linear_cell.1} parent=0 // pred_region
    _
  $region5: #{li_linear_cell.1} parent=0 // pred_fallthru
    _
  // Predicated region
  $region6: #{li_linear_cell.1} parent=0 // pred_check
    _
  $region7: #{li_linear_cell.1} parent=0 // pred_check_branch
    %14 = sbr.rel (0) target = $region9
  $region8: #{li_linear_cell.1} parent=0 // pred_region
    _
  $region9: #{li_linear_cell.1} parent=0 // pred_fallthru
    _
  // Predicated region
  $region10: #{li_linear_cell.1} parent=0 // pred_check
    _
  $region11: #{li_linear_cell.1} parent=0 // pred_check_branch
    %16 = sbr.rel (0) target = $region13
  $region12: #{li_linear_cell.1} parent=0 // pred_region
    _
  $region13: #{li_linear_cell.1} parent=0 // pred_fallthru
    _
  // Predicated region
  $region14: #{li_linear_cell.1} parent=0 // pred_check
    _
  $region15: #{li_linear_cell.1} parent=0 // pred_check_branch
    %18 = sbr.rel (0) target = $region17
  $region16: #{li_linear_cell.1} parent=0 // pred_region
    _
  $region17: #{li_linear_cell.1} parent=0 // pred_fallthru
    _
  %v19 = vld [vmem:[%s0] sm:$0xff]
  %v20 = vld [vmem:[%s1] sm:$0xff]
  %v21 = vld [vmem:[%s1 + $0x8] sm:$0xff]
  %v22 = vld [vmem:[%s1 + $0x10] sm:$0xff]
  %v23 = vld [vmem:[%s1 + $0x18] sm:$0xff]
  %v24 = vld [vmem:[%s1 + $0x20] sm:$0xff]
  %v25 = vld [vmem:[%s1 + $0x28] sm:$0xff]
  %v26 = vld [vmem:[%s1 + $0x30] sm:$0xff]
  %v27 = vld [vmem:[%s1 + $0x38] sm:$0xff]
  %v28 = vld [vmem:[%s1 + $0x40] sm:$0xff]
  %v29 = vld [vmem:[%s1 + $0x48] sm:$0xff]
  %v30 = vld [vmem:[%s1 + $0x50] sm:$0xff]
  %v31 = vld [vmem:[%s1 + $0x58] sm:$0xff]
  %v32 = vld [vmem:[%s1 + $0x60] sm:$0xff]
  %v33 = vld [vmem:[%s1 + $0x68] sm:$0xff]
  %v34 = vld [vmem:[%s1 + $0x70] sm:$0xff]
  %v35 = vld [vmem:[%s1 + $0x78] sm:$0xff]
  %36 = vmatprep.subr.mxu0 0.0
  %37 = vmatpush1.xpose.msra.mxu0 %v35
  %38 = vmatprep.subr.mxu0 0.0
  %39 = vmatpush1.xpose.msra.mxu0 %v34
  %40 = vmatprep.subr.mxu0 0.0
  %41 = vmatpush1.xpose.msra.mxu0 %v33
  %42 = vmatprep.subr.mxu0 0.0
  %43 = vmatpush1.xpose.msra.mxu0 %v32
  %44 = vmatprep.subr.mxu0 0.0
  %45 = vmatpush1.xpose.msra.mxu0 %v31
  %46 = vmatprep.subr.mxu0 0.0
  %47 = vmatpush1.xpose.msra.mxu0 %v30
  %48 = vmatprep.subr.mxu0 0.0
  %49 = vmatpush1.xpose.msra.mxu0 %v29
  %50 = vmatprep.subr.mxu0 0.0
  %51 = vmatpush1.xpose.msra.mxu0 %v28
  %52 = vmatprep.subr.mxu0 0.0
  %53 = vmatpush1.xpose.msra.mxu0 %v27
  %54 = vmatprep.subr.mxu0 0.0
  %55 = vmatpush1.xpose.msra.mxu0 %v26
  %56 = vmatprep.subr.mxu0 0.0
  %57 = vmatpush1.xpose.msra.mxu0 %v25
  %58 = vmatprep.subr.mxu0 0.0
  %59 = vmatpush1.xpose.msra.mxu0 %v24
  %60 = vmatprep.subr.mxu0 0.0
  %61 = vmatpush1.xpose.msra.mxu0 %v23
  %62 = vmatprep.subr.mxu0 0.0
  %63 = vmatpush1.xpose.msra.mxu0 %v22
  %64 = vmatprep.subr.mxu0 0.0
  %65 = vmatpush1.xpose.msra.mxu0 %v21
  %66 = vmatprep.subr.mxu0 0.0
  %67 = vmatpush1.xpose.msra.mxu0 %v20
  %68 = vmatprep.subr.mxu0 0.0
  %69 = vmatpush2.xpose.msra.mxu0 0.0
  %70 = vmatprep.subr.mxu0 0.0
  %71 = vmatpush2.xpose.msra.mxu0 0.0
  %72 = vmatprep.subr.mxu0 0.0
  %73 = vmatpush2.xpose.msra.mxu0 0.0
  %74 = vmatprep.subr.mxu0 0.0
  %75 = vmatpush2.xpose.msra.mxu0 0.0
  %76 = vmatprep.subr.mxu0 0.0
  %77 = vmatpush2.xpose.msra.mxu0 0.0
  %78 = vmatprep.subr.mxu0 0.0
  %79 = vmatpush2.xpose.msra.mxu0 0.0
  %80 = vmatprep.subr.mxu0 0.0
  %81 = vmatpush2.xpose.msra.mxu0 0.0
  %82 = vmatprep.subr.mxu0 0.0
  %83 = vmatpush2.xpose.msra.mxu0 0.0
  %84 = vmatprep.subr.mxu0 0.0
  %85 = vmatpush2.xpose.msra.mxu0 0.0
  %86 = vmatprep.subr.mxu0 0.0
  %87 = vmatpush2.xpose.msra.mxu0 0.0
  %88 = vmatprep.subr.mxu0 0.0
  %89 = vmatpush2.xpose.msra.mxu0 0.0
  %90 = vmatprep.subr.mxu0 0.0
  %91 = vmatpush2.xpose.msra.mxu0 0.0
  %92 = vmatprep.subr.mxu0 0.0
  %93 = vmatpush2.xpose.msra.mxu0 0.0
  %94 = vmatprep.subr.mxu0 0.0
  %95 = vmatpush2.xpose.msra.mxu0 0.0
  %96 = vmatprep.subr.mxu0 0.0
  %97 = vmatpush2.xpose.msra.mxu0 0.0
  %98 = vmatprep.subr.mxu0 0.0
  %99 = vmatpush2.xpose.msra.mxu0 0.0
  %100 = vmatprep.mubr.f32.mxu0 0.0
  %101 = vmatmul.mubr.f32.gmra.mxu0 %v19
  %v102 = vpop.f32.mrf.mxu0
  %v103 = vadd.f32 0.0, %v102
  %v104 = vpop.f32.mrf.mxu0
  %105 = vdwg.mxu0
  %v106 = vld [vmem:[%s3] sm:$0xff]
  %v107 = vadd.f32 %v106, %v103
  %v108 = vld [vmem:[%s2] sm:$0xff]
  %v109 = vmul.f32 %v108, 0.9
  %v110 = vmul.f32 %v107, 0.1
  %v111 = vadd.f32 %v110, 0.0
  %v112 = vadd.f32 %v109, %v111
  %113 = vst [vmem:[%s4] sm:$0xff] %v112
  %v114 = vmul.f32 %v107, 0.8
  %115 = vst [vmem:[%s5] sm:$0xff] %v114
  // Predicated region
  $region18: #{li_linear_cell.1} parent=0 // pred_check
    _
  $region19: #{li_linear_cell.1} parent=0 // pred_check_branch
    %117 = sbr.rel (0) target = $region21
  $region20: #{li_linear_cell.1} parent=0 // pred_region
    _
  $region21: #{li_linear_cell.1} parent=0 // pred_fallthru
    _
  // Predicated region
  $region22: #{li_linear_cell.1} parent=0 // pred_check
    _
  $region23: #{li_linear_cell.1} parent=0 // pred_check_branch
    %119 = sbr.rel (0) target = $region25
  $region24: #{li_linear_cell.1} parent=0 // pred_region
    _
  $region25: #{li_linear_cell.1} parent=0 // pred_fallthru
    _
  // Predicated region
  $region26: #{li_linear_cell.1} parent=0 // pred_check
    _
  $region27: #{li_linear_cell.1} parent=0 // pred_check_branch
    %121 = sbr.rel (0) target = $region29
  $region28: #{li_linear_cell.1} parent=0 // pred_region
    _
  $region29: #{li_linear_cell.1} parent=0 // pred_fallthru
    _
  // Predicated region
  $region30: #{li_linear_cell.1} parent=0 // pred_check
    _
  $region31: #{li_linear_cell.1} parent=0 // pred_check_branch
    %123 = sbr.rel (0) target = $region33
  $region32: #{li_linear_cell.1} parent=0 // pred_region
    _
  $region33: #{li_linear_cell.1} parent=0 // pred_fallthru
    _

</llo_original>
